<compile_context>
chip_gen: v7x
topology: tpu7x:2x2x1
jax: 0.10.0
libtpu: 0.0.40
codegen_flags: <defaults>
</compile_context>

<pallas_src>
import jax
import jax.numpy as jnp
import numpy as np
from jax.experimental import pallas as pl
from jax.experimental.pallas import tpu as pltpu

FEAT_IN = 51
FEAT_PAD = 64  # lane/sublane-friendly padded K for layer 1


def mlp_kernel(x_ref,
               w1_ref, b1_ref,
               w2_ref, b2_ref,
               w3_ref, b3_ref,
               w4_ref, b4_ref,
               o_ref):
    # hidden1 + ReLU : (TM,64) @ (64,128) + (1,128)
    h = jnp.dot(x_ref[...], w1_ref[...], preferred_element_type=jnp.float32)
    h = jnp.maximum(h + b1_ref[...], 0.0)
    # hidden2 + ReLU : (TM,128) @ (128,32) + (1,32)
    h = jnp.dot(h, w2_ref[...], preferred_element_type=jnp.float32)
    h = jnp.maximum(h + b2_ref[...], 0.0)
    # hidden3 + ReLU : (TM,32) @ (32,8) + (1,8)
    h = jnp.dot(h, w3_ref[...], preferred_element_type=jnp.float32)
    h = jnp.maximum(h + b3_ref[...], 0.0)
    # output (no activation) : (TM,8) @ (8,2) + (1,2)
    h = jnp.dot(h, w4_ref[...], preferred_element_type=jnp.float32)
    o_ref[...] = (h + b4_ref[...]).astype(o_ref.dtype)


def multiclass_forward(x, params, *, tm=1024):
    """x: (B, 51) float32. params: dict of (in,out) weights + (1,out) biases."""
    B, F = x.shape
    assert F == FEAT_IN

    # Row tile: large enough to amortize per-step overhead, but never over-pad
    # tiny batches. Keep sublane (8) alignment.
    tm_eff = min(tm, max(8, ((B + 7) // 8) * 8))
    grid_b = pl.cdiv(B, tm_eff)
    b_pad = grid_b * tm_eff

    # Host-side zero padding: batch -> multiple of tile, features 51 -> 64.
    x_p = jnp.pad(x, ((0, b_pad - B), (0, FEAT_PAD - F)))
    w1_p = jnp.pad(params["w1"], ((0, FEAT_PAD - F), (0, 0)))

    args = (x_p,
            w1_p, params["b1"],
            params["w2"], params["b2"],
            params["w3"], params["b3"],
            params["w4"], params["b4"])

    # Weights/biases: full-array block, constant index_map -> resident in VMEM
    # across all batch tiles (fetched once, not per grid step).
    def resident(a):
        nd = a.ndim
        return pl.BlockSpec(a.shape, lambda i, _nd=nd: (0,) * _nd,
                            memory_space=pltpu.VMEM)

    in_specs = [pl.BlockSpec((tm_eff, FEAT_PAD), lambda i: (i, 0),
                             memory_space=pltpu.VMEM)]
    in_specs += [resident(a) for a in args[1:]]

    out = pl.pallas_call(
        mlp_kernel,
        out_shape=jax.ShapeDtypeStruct((b_pad, 2), jnp.float32),
        grid=(grid_b,),
        in_specs=in_specs,
        out_specs=pl.BlockSpec((tm_eff, 2), lambda i: (i, 0),
                               memory_space=pltpu.VMEM),
        compiler_params=pltpu.CompilerParams(
            dimension_semantics=("parallel",)),
    )(*args)
    return out[:B]


def init_params(key):
    """Deterministic init mirroring the PyTorch module's init scheme."""
    def kaiming_uniform(key, fan_in, fan_out):
        # torch kaiming_uniform_ with nonlinearity='relu': gain = sqrt(2),
        # bound = gain * sqrt(3 / fan_in). Stored as (in, out) for the kernel.
        bound = np.sqrt(2.0) * np.sqrt(3.0 / fan_in)
        return jax.random.uniform(key, (fan_in, fan_out), jnp.float32,
                                  minval=-bound, maxval=bound)

    def xavier_uniform(key, fan_in, fan_out):
        bound = np.sqrt(6.0 / (fan_in + fan_out))
        return jax.random.uniform(key, (fan_in, fan_out), jnp.float32,
                                  minval=-bound, maxval=bound)

    k1, k2, k3, k4 = jax.random.split(key, 4)
    return {
        "w1": kaiming_uniform(k1, 51, 128),  "b1": jnp.zeros((1, 128), jnp.float32),
        "w2": kaiming_uniform(k2, 128, 32),  "b2": jnp.zeros((1, 32), jnp.float32),
        "w3": kaiming_uniform(k3, 32, 8),    "b3": jnp.zeros((1, 8), jnp.float32),
        "w4": xavier_uniform(k4, 8, 2),      "b4": jnp.zeros((1, 2), jnp.float32),
    }


def reference_forward(x, p):
    h = jnp.maximum(x @ p["w1"] + p["b1"], 0.0)
    h = jnp.maximum(h @ p["w2"] + p["b2"], 0.0)
    h = jnp.maximum(h @ p["w3"] + p["b3"], 0.0)
    return h @ p["w4"] + p["b4"]


if __name__ == "__main__":
    key = jax.random.PRNGKey(0)
    pkey, xkey1, xkey2 = jax.random.split(key, 3)
    params = init_params(pkey)

    # Small batch: single tile (tm clamps to 8), exercises the base path.
    B_small = 8
    x_small = jax.random.normal(xkey1, (B_small, FEAT_IN), jnp.float32)
    out_small = jax.block_until_ready(multiclass_forward(x_small, params))
    np.testing.assert_allclose(np.asarray(out_small),
                               np.asarray(reference_forward(x_small, params)),
                               rtol=1e-5, atol=1e-5)
    assert out_small.shape == (B_small, 2) and out_small.dtype == jnp.float32

    # Ragged multi-tile batch: exercises the grid, resident weights, and the
    # host-side batch padding / final slice.
    B_big = 600  # -> tm=512, grid=(2,), padded to 1024 rows
    x_big = jax.random.normal(xkey2, (B_big, FEAT_IN), jnp.float32)
    out_big = jax.block_until_ready(multiclass_forward(x_big, params, tm=512))
    np.testing.assert_allclose(np.asarray(out_big),
                               np.asarray(reference_forward(x_big, params)),
                               rtol=1e-5, atol=1e-5)
    assert out_big.shape == (B_big, 2) and out_big.dtype == jnp.float32

    print("KERNEL_OK")
</pallas_src>

<mosaic_0001>
module attributes {stable_mosaic.version = 11 : i64} {
  func.func @mlp_kernel(%arg0: i32, %arg1: memref<8x64xf32, #tpu.memory_space<vmem>>, %arg2: memref<64x128xf32, #tpu.memory_space<vmem>>, %arg3: memref<1x128xf32, #tpu.memory_space<vmem>>, %arg4: memref<128x32xf32, #tpu.memory_space<vmem>>, %arg5: memref<1x32xf32, #tpu.memory_space<vmem>>, %arg6: memref<32x8xf32, #tpu.memory_space<vmem>>, %arg7: memref<1x8xf32, #tpu.memory_space<vmem>>, %arg8: memref<8x2xf32, #tpu.memory_space<vmem>>, %arg9: memref<1x2xf32, #tpu.memory_space<vmem>>, %arg10: memref<8x2xf32, #tpu.memory_space<vmem>>) attributes {dimension_semantics = [#tpu.dimension_semantics<parallel>], iteration_bounds = array<i64: 1>, scalar_prefetch = 0 : i64, scratch_operands = 0 : i64, tpu.core_type = #tpu.core_type<tc>, window_params = [{transform_indices = @transform_0, window_bounds = array<i64: 8, 64>}, {pipeline_mode = #tpu.pipeline_mode<synchronous>, transform_indices = @transform_1, window_bounds = array<i64: 64, 128>}, {pipeline_mode = #tpu.pipeline_mode<synchronous>, transform_indices = @transform_2, window_bounds = array<i64: 1, 128>}, {pipeline_mode = #tpu.pipeline_mode<synchronous>, transform_indices = @transform_3, window_bounds = array<i64: 128, 32>}, {pipeline_mode = #tpu.pipeline_mode<synchronous>, transform_indices = @transform_4, window_bounds = array<i64: 1, 32>}, {pipeline_mode = #tpu.pipeline_mode<synchronous>, transform_indices = @transform_5, window_bounds = array<i64: 32, 8>}, {pipeline_mode = #tpu.pipeline_mode<synchronous>, transform_indices = @transform_6, window_bounds = array<i64: 1, 8>}, {pipeline_mode = #tpu.pipeline_mode<synchronous>, transform_indices = @transform_7, window_bounds = array<i64: 8, 2>}, {pipeline_mode = #tpu.pipeline_mode<synchronous>, transform_indices = @transform_8, window_bounds = array<i64: 1, 2>}, {transform_indices = @transform_9, window_bounds = array<i64: 8, 2>}]} {
    %c0 = arith.constant 0 : index
    %c0_0 = arith.constant 0 : index
    %0 = vector.load %arg1[%c0, %c0_0] : memref<8x64xf32, #tpu.memory_space<vmem>>, vector<8x64xf32>
    %c0_1 = arith.constant 0 : index
    %c0_2 = arith.constant 0 : index
    %1 = vector.load %arg2[%c0_1, %c0_2] : memref<64x128xf32, #tpu.memory_space<vmem>>, vector<64x128xf32>
    %cst = arith.constant dense<0.000000e+00> : vector<8x128xf32>
    %2 = tpu.matmul %0, %1, %cst {dimension_numbers = #tpu.dot_dimension_numbers<[1], [0], [0], [1], [0, 0, 1, 1], [], []>} : vector<8x64xf32>, vector<64x128xf32>, vector<8x128xf32> -> vector<8x128xf32>
    %c0_3 = arith.constant 0 : index
    %c0_4 = arith.constant 0 : index
    %3 = vector.load %arg3[%c0_3, %c0_4] : memref<1x128xf32, #tpu.memory_space<vmem>>, vector<1x128xf32>
    %4 = vector.broadcast %3 : vector<1x128xf32> to vector<8x128xf32>
    %5 = arith.addf %2, %4 : vector<8x128xf32>
    %cst_5 = arith.constant 0.000000e+00 : f32
    %6 = vector.broadcast %cst_5 : f32 to vector<8x128xf32>
    %7 = arith.maximumf %5, %6 : vector<8x128xf32>
    %c0_6 = arith.constant 0 : index
    %c0_7 = arith.constant 0 : index
    %8 = vector.load %arg4[%c0_6, %c0_7] : memref<128x32xf32, #tpu.memory_space<vmem>>, vector<128x32xf32>
    %cst_8 = arith.constant dense<0.000000e+00> : vector<8x32xf32>
    %9 = tpu.matmul %7, %8, %cst_8 {dimension_numbers = #tpu.dot_dimension_numbers<[1], [0], [0], [1], [0, 0, 1, 1], [], []>} : vector<8x128xf32>, vector<128x32xf32>, vector<8x32xf32> -> vector<8x32xf32>
    %c0_9 = arith.constant 0 : index
    %c0_10 = arith.constant 0 : index
    %10 = vector.load %arg5[%c0_9, %c0_10] : memref<1x32xf32, #tpu.memory_space<vmem>>, vector<1x32xf32>
    %11 = vector.broadcast %10 : vector<1x32xf32> to vector<8x32xf32>
    %12 = arith.addf %9, %11 : vector<8x32xf32>
    %cst_11 = arith.constant 0.000000e+00 : f32
    %13 = vector.broadcast %cst_11 : f32 to vector<8x32xf32>
    %14 = arith.maximumf %12, %13 : vector<8x32xf32>
    %c0_12 = arith.constant 0 : index
    %c0_13 = arith.constant 0 : index
    %15 = vector.load %arg6[%c0_12, %c0_13] : memref<32x8xf32, #tpu.memory_space<vmem>>, vector<32x8xf32>
    %cst_14 = arith.constant dense<0.000000e+00> : vector<8x8xf32>
    %16 = tpu.matmul %14, %15, %cst_14 {dimension_numbers = #tpu.dot_dimension_numbers<[1], [0], [0], [1], [0, 0, 1, 1], [], []>} : vector<8x32xf32>, vector<32x8xf32>, vector<8x8xf32> -> vector<8x8xf32>
    %c0_15 = arith.constant 0 : index
    %c0_16 = arith.constant 0 : index
    %17 = vector.load %arg7[%c0_15, %c0_16] : memref<1x8xf32, #tpu.memory_space<vmem>>, vector<1x8xf32>
    %18 = vector.broadcast %17 : vector<1x8xf32> to vector<8x8xf32>
    %19 = arith.addf %16, %18 : vector<8x8xf32>
    %cst_17 = arith.constant 0.000000e+00 : f32
    %20 = vector.broadcast %cst_17 : f32 to vector<8x8xf32>
    %21 = arith.maximumf %19, %20 : vector<8x8xf32>
    %c0_18 = arith.constant 0 : index
    %c0_19 = arith.constant 0 : index
    %22 = vector.load %arg8[%c0_18, %c0_19] : memref<8x2xf32, #tpu.memory_space<vmem>>, vector<8x2xf32>
    %cst_20 = arith.constant dense<0.000000e+00> : vector<8x2xf32>
    %23 = tpu.matmul %21, %22, %cst_20 {dimension_numbers = #tpu.dot_dimension_numbers<[1], [0], [0], [1], [0, 0, 1, 1], [], []>} : vector<8x8xf32>, vector<8x2xf32>, vector<8x2xf32> -> vector<8x2xf32>
    %c0_21 = arith.constant 0 : index
    %c0_22 = arith.constant 0 : index
    %24 = vector.load %arg9[%c0_21, %c0_22] : memref<1x2xf32, #tpu.memory_space<vmem>>, vector<1x2xf32>
    %25 = vector.broadcast %24 : vector<1x2xf32> to vector<8x2xf32>
    %26 = arith.addf %23, %25 : vector<8x2xf32>
    %c0_23 = arith.constant 0 : index
    %c0_24 = arith.constant 0 : index
    %27 = vector.load %arg10[%c0_23, %c0_24] : memref<8x2xf32, #tpu.memory_space<vmem>>, vector<8x2xf32>
    tpu.vector_store %arg10[%c0_23, %c0_24], %26 {strides = array<i32>} : memref<8x2xf32, #tpu.memory_space<vmem>>, vector<8x2xf32>,
    return
  }
  func.func @transform_0(%arg0: i32) -> (i32, i32) {
    %c0_i32 = arith.constant 0 : i32
    %c0_i32_0 = arith.constant 0 : i32
    return %arg0, %c0_i32 : i32, i32
  }
  func.func @transform_1(%arg0: i32) -> (i32, i32) {
    %c0_i32 = arith.constant 0 : i32
    %c0_i32_0 = arith.constant 0 : i32
    %c0_i32_1 = arith.constant 0 : i32
    return %c0_i32, %c0_i32_0 : i32, i32
  }
  func.func @transform_2(%arg0: i32) -> (i32, i32) {
    %c0_i32 = arith.constant 0 : i32
    %c0_i32_0 = arith.constant 0 : i32
    %c0_i32_1 = arith.constant 0 : i32
    return %c0_i32, %c0_i32_0 : i32, i32
  }
  func.func @transform_3(%arg0: i32) -> (i32, i32) {
    %c0_i32 = arith.constant 0 : i32
    %c0_i32_0 = arith.constant 0 : i32
    %c0_i32_1 = arith.constant 0 : i32
    return %c0_i32, %c0_i32_0 : i32, i32
  }
  func.func @transform_4(%arg0: i32) -> (i32, i32) {
    %c0_i32 = arith.constant 0 : i32
    %c0_i32_0 = arith.constant 0 : i32
    %c0_i32_1 = arith.constant 0 : i32
    return %c0_i32, %c0_i32_0 : i32, i32
  }
  func.func @transform_5(%arg0: i32) -> (i32, i32) {
    %c0_i32 = arith.constant 0 : i32
    %c0_i32_0 = arith.constant 0 : i32
    %c0_i32_1 = arith.constant 0 : i32
    return %c0_i32, %c0_i32_0 : i32, i32
  }
  func.func @transform_6(%arg0: i32) -> (i32, i32) {
    %c0_i32 = arith.constant 0 : i32
    %c0_i32_0 = arith.constant 0 : i32
    %c0_i32_1 = arith.constant 0 : i32
    return %c0_i32, %c0_i32_0 : i32, i32
  }
  func.func @transform_7(%arg0: i32) -> (i32, i32) {
    %c0_i32 = arith.constant 0 : i32
    %c0_i32_0 = arith.constant 0 : i32
    %c0_i32_1 = arith.constant 0 : i32
    return %c0_i32, %c0_i32_0 : i32, i32
  }
  func.func @transform_8(%arg0: i32) -> (i32, i32) {
    %c0_i32 = arith.constant 0 : i32
    %c0_i32_0 = arith.constant 0 : i32
    %c0_i32_1 = arith.constant 0 : i32
    return %c0_i32, %c0_i32_0 : i32, i32
  }
  func.func @transform_9(%arg0: i32) -> (i32, i32) {
    %c0_i32 = arith.constant 0 : i32
    %c0_i32_0 = arith.constant 0 : i32
    return %arg0, %c0_i32 : i32, i32
  }
}

</mosaic_0001>

<llo_original>
// kernel: tpu_custom_call.1
$region0: #{tpu_custom_call.1}
  #allocation0 [shape = 'u32[]', space=smem, size = 0x4, offset = 0x4, fixed_abs, tag = 'smem constant byte address 0x4 - core index']
  #allocation1 [shape = 'u32[144,128]{1,0:T(1,128)}', space=vmem, size = 0x12000, scoped, tag = 'internal scratch']
  %s0 = inlined_call_operand.vmem [shape: f32[8,64], index: 0, kind: input, shape index: {}]
  %s1 = inlined_call_operand.vmem [shape: f32[64,128], index: 1, kind: input, shape index: {}]
  %s2 = inlined_call_operand.vmem [shape: f32[1,128], index: 2, kind: input, shape index: {}]
  %s3 = inlined_call_operand.vmem [shape: f32[128,32], index: 3, kind: input, shape index: {}]
  %s4 = inlined_call_operand.vmem [shape: f32[1,32], index: 4, kind: input, shape index: {}]
  %s5 = inlined_call_operand.vmem [shape: f32[32,8], index: 5, kind: input, shape index: {}]
  %s6 = inlined_call_operand.vmem [shape: f32[1,8], index: 6, kind: input, shape index: {}]
  %s7 = inlined_call_operand.vmem [shape: f32[8,2], index: 7, kind: input, shape index: {}]
  %s8 = inlined_call_operand.vmem [shape: f32[1,2], index: 8, kind: input, shape index: {}]
  %s9 = inlined_call_operand.vmem [shape: f32[8,2], index: 9, kind: output, shape index: {}]
  %s10 = sld [smem:[#allocation0]]
  $region46: #{tpu_custom_call.1} parent=0
    _
  %s12 = ssub.s32 1, %s10
  %s13 = scalar_select 0, %s12, %s10
  // Predicated region
  $region2: #{tpu_custom_call.1} parent=0 // pred_check
    _
  $region3: #{tpu_custom_call.1} parent=0 // pred_check_branch
    %15 = sbr.rel (0) target = $region5
  $region4: #{tpu_custom_call.1} parent=0 // pred_region
    _
  $region5: #{tpu_custom_call.1} parent=0 // pred_fallthru
    _
  // Predicated region
  $region6: #{tpu_custom_call.1} parent=0 // pred_check
    _
  $region7: #{tpu_custom_call.1} parent=0 // pred_check_branch
    %17 = sbr.rel (0) target = $region9
  $region8: #{tpu_custom_call.1} parent=0 // pred_region
    _
  $region9: #{tpu_custom_call.1} parent=0 // pred_fallthru
    _
  // Predicated region
  $region10: #{tpu_custom_call.1} parent=0 // pred_check
    _
  $region11: #{tpu_custom_call.1} parent=0 // pred_check_branch
    %19 = sbr.rel (0) target = $region13
  $region12: #{tpu_custom_call.1} parent=0 // pred_region
    _
  $region13: #{tpu_custom_call.1} parent=0 // pred_fallthru
    _
  // Predicated region
  $region14: #{tpu_custom_call.1} parent=0 // pred_check
    _
  $region15: #{tpu_custom_call.1} parent=0 // pred_check_branch
    %21 = sbr.rel (0) target = $region17
  $region16: #{tpu_custom_call.1} parent=0 // pred_region
    _
  $region17: #{tpu_custom_call.1} parent=0 // pred_fallthru
    _
  // Predicated region
  $region18: #{tpu_custom_call.1} parent=0 // pred_check
    _
  $region19: #{tpu_custom_call.1} parent=0 // pred_check_branch
    %23 = sbr.rel (0) target = $region21
  $region20: #{tpu_custom_call.1} parent=0 // pred_region
    _
  $region21: #{tpu_custom_call.1} parent=0 // pred_fallthru
    _
  // Predicated region
  $region22: #{tpu_custom_call.1} parent=0 // pred_check
    _
  $region23: #{tpu_custom_call.1} parent=0 // pred_check_branch
    %25 = sbr.rel (0) target = $region25
  $region24: #{tpu_custom_call.1} parent=0 // pred_region
    _
  $region25: #{tpu_custom_call.1} parent=0 // pred_fallthru
    _
  // Predicated region
  $region26: #{tpu_custom_call.1} parent=0 // pred_check
    _
  $region27: #{tpu_custom_call.1} parent=0 // pred_check_branch
    %27 = sbr.rel (0) target = $region29
  $region28: #{tpu_custom_call.1} parent=0 // pred_region
    _
  $region29: #{tpu_custom_call.1} parent=0 // pred_fallthru
    _
  // Predicated region
  $region30: #{tpu_custom_call.1} parent=0 // pred_check
    _
  $region31: #{tpu_custom_call.1} parent=0 // pred_check_branch
    %29 = sbr.rel (0) target = $region33
  $region32: #{tpu_custom_call.1} parent=0 // pred_region
    _
  $region33: #{tpu_custom_call.1} parent=0 // pred_fallthru
    _
  // Predicated region
  $region34: #{tpu_custom_call.1} parent=0 // pred_check
    _
  $region35: #{tpu_custom_call.1} parent=0 // pred_check_branch
    %31 = sbr.rel (0) target = $region37
  $region36: #{tpu_custom_call.1} parent=0 // pred_region
    _
  $region37: #{tpu_custom_call.1} parent=0 // pred_fallthru
    _
  %v32 = vld [vmem:[%s0] sm:$0xff]
  %v33 = vld [vmem:[%s1] sm:$0xff]
  %v34 = vld [vmem:[%s1 + $0x8] sm:$0xff]
  %v35 = vld [vmem:[%s1 + $0x10] sm:$0xff]
  %v36 = vld [vmem:[%s1 + $0x18] sm:$0xff]
  %v37 = vld [vmem:[%s1 + $0x20] sm:$0xff]
  %v38 = vld [vmem:[%s1 + $0x28] sm:$0xff]
  %v39 = vld [vmem:[%s1 + $0x30] sm:$0xff]
  %v40 = vld [vmem:[%s1 + $0x38] sm:$0xff]
  %v41 = vld [vmem:[%s2] sm:$0x1]
  %v43 = vlaneseq
  %v44 = vshrl.u32 %v43, 7
  %v45 = vsub.s32 0, %v44
  %v46 = vrot.slane %v41, %v45
  %vm48 = vcmask 523264
  %v50 = vsel %vm48, %v32, 0
  %52 = vmatprep.subr.mxu0 0.0
  %53 = vmatpush1.msra.mxu0 %v33
  %54 = vmatprep.subr.mxu0 0.0
  %55 = vmatpush1.msra.mxu0 %v34
  %56 = vmatprep.subr.mxu0 0.0
  %57 = vmatpush1.msra.mxu0 %v35
  %58 = vmatprep.subr.mxu0 0.0
  %59 = vmatpush1.msra.mxu0 %v36
  %60 = vmatprep.subr.mxu0 0.0
  %61 = vmatpush1.msra.mxu0 %v37
  %62 = vmatprep.subr.mxu0 0.0
  %63 = vmatpush1.msra.mxu0 %v38
  %64 = vmatprep.subr.mxu0 0.0
  %65 = vmatpush1.msra.mxu0 %v39
  %66 = vmatprep.subr.mxu0 0.0
  %67 = vmatpush1.msra.mxu0 %v40
  %68 = vmatprep.subr.mxu0 0.0
  %69 = vmatpush1.msra.mxu0 0.0
  %70 = vmatprep.subr.mxu0 0.0
  %71 = vmatpush1.msra.mxu0 0.0
  %72 = vmatprep.subr.mxu0 0.0
  %73 = vmatpush1.msra.mxu0 0.0
  %74 = vmatprep.subr.mxu0 0.0
  %75 = vmatpush1.msra.mxu0 0.0
  %76 = vmatprep.subr.mxu0 0.0
  %77 = vmatpush1.msra.mxu0 0.0
  %78 = vmatprep.subr.mxu0 0.0
  %79 = vmatpush1.msra.mxu0 0.0
  %80 = vmatprep.subr.mxu0 0.0
  %81 = vmatpush1.msra.mxu0 0.0
  %82 = vmatprep.subr.mxu0 0.0
  %83 = vmatpush1.msra.mxu0 0.0
  %84 = vmatprep.subr.mxu0 0.0
  %85 = vmatpush1.msra.mxu0 0.0
  %86 = vmatprep.subr.mxu0 0.0
  %87 = vmatpush1.msra.mxu0 0.0
  %88 = vmatprep.subr.mxu0 0.0
  %89 = vmatpush1.msra.mxu0 0.0
  %90 = vmatprep.subr.mxu0 0.0
  %91 = vmatpush1.msra.mxu0 0.0
  %92 = vmatprep.subr.mxu0 0.0
  %93 = vmatpush1.msra.mxu0 0.0
  %94 = vmatprep.subr.mxu0 0.0
  %95 = vmatpush1.msra.mxu0 0.0
  %96 = vmatprep.subr.mxu0 0.0
  %97 = vmatpush1.msra.mxu0 0.0
  %98 = vmatprep.subr.mxu0 0.0
  %99 = vmatpush1.msra.mxu0 0.0
  %100 = vmatprep.subr.mxu0 0.0
  %101 = vmatpush1.msra.mxu0 0.0
  %102 = vmatprep.subr.mxu0 0.0
  %103 = vmatpush1.msra.mxu0 0.0
  %104 = vmatprep.subr.mxu0 0.0
  %105 = vmatpush1.msra.mxu0 0.0
  %106 = vmatprep.subr.mxu0 0.0
  %107 = vmatpush1.msra.mxu0 0.0
  %108 = vmatprep.subr.mxu0 0.0
  %109 = vmatpush1.msra.mxu0 0.0
  %110 = vmatprep.subr.mxu0 0.0
  %111 = vmatpush1.msra.mxu0 0.0
  %112 = vmatprep.subr.mxu0 0.0
  %113 = vmatpush1.msra.mxu0 0.0
  %114 = vmatprep.subr.mxu0 0.0
  %115 = vmatpush1.msra.mxu0 0.0
  %116 = vmatprep.mubr.f32.mxu0 0.0
  %117 = vmatmul.mubr.f32.gmra.mrb[0].mxu0 %v50
  %v118 = vpop.f32.mrb[0].mxu0
  %v119 = vadd.f32 %v46, %v118
  %v120 = vpop.f32.mrb[0].mxu0
  %121 = vdwg.mxu0
  %v122 = vmax.f32 %v119, 0.0
  %v123 = vld [vmem:[%s3] sm:$0xff]
  %v124 = vld [vmem:[%s3 + $0x8] sm:$0xff]
  %v125 = vld [vmem:[%s3 + $0x10] sm:$0xff]
  %v126 = vld [vmem:[%s3 + $0x18] sm:$0xff]
  %v127 = vld [vmem:[%s3 + $0x20] sm:$0xff]
  %v128 = vld [vmem:[%s3 + $0x28] sm:$0xff]
  %v129 = vld [vmem:[%s3 + $0x30] sm:$0xff]
  %v130 = vld [vmem:[%s3 + $0x38] sm:$0xff]
  %v131 = vld [vmem:[%s3 + $0x40] sm:$0xff]
  %v132 = vld [vmem:[%s3 + $0x48] sm:$0xff]
  %v133 = vld [vmem:[%s3 + $0x50] sm:$0xff]
  %v134 = vld [vmem:[%s3 + $0x58] sm:$0xff]
  %v135 = vld [vmem:[%s3 + $0x60] sm:$0xff]
  %v136 = vld [vmem:[%s3 + $0x68] sm:$0xff]
  %v137 = vld [vmem:[%s3 + $0x70] sm:$0xff]
  %v138 = vld [vmem:[%s3 + $0x78] sm:$0xff]
  %v139 = vld [vmem:[%s4] sm:$0x1]
  %v141 = vlaneseq
  %v142 = vshrl.u32 %v141, 7
  %v143 = vsub.s32 0, %v142
  %v144 = vrot.slane %v139, %v143
  %146 = vmatprep.subr.mxu0 0.0
  %147 = vmatpush1.msra.mxu0 %v123
  %148 = vmatprep.subr.mxu0 0.0
  %149 = vmatpush1.msra.mxu0 %v124
  %150 = vmatprep.subr.mxu0 0.0
  %151 = vmatpush1.msra.mxu0 %v125
  %152 = vmatprep.subr.mxu0 0.0
  %153 = vmatpush1.msra.mxu0 %v126
  %154 = vmatprep.subr.mxu0 0.0
  %155 = vmatpush1.msra.mxu0 %v127
  %156 = vmatprep.subr.mxu0 0.0
  %157 = vmatpush1.msra.mxu0 %v128
  %158 = vmatprep.subr.mxu0 0.0
  %159 = vmatpush1.msra.mxu0 %v129
  %160 = vmatprep.subr.mxu0 0.0
  %161 = vmatpush1.msra.mxu0 %v130
  %162 = vmatprep.subr.mxu0 0.0
  %163 = vmatpush1.msra.mxu0 %v131
  %164 = vmatprep.subr.mxu0 0.0
  %165 = vmatpush1.msra.mxu0 %v132
  %166 = vmatprep.subr.mxu0 0.0
  %167 = vmatpush1.msra.mxu0 %v133
  %168 = vmatprep.subr.mxu0 0.0
  %169 = vmatpush1.msra.mxu0 %v134
  %170 = vmatprep.subr.mxu0 0.0
  %171 = vmatpush1.msra.mxu0 %v135
  %172 = vmatprep.subr.mxu0 0.0
  %173 = vmatpush1.msra.mxu0 %v136
  %174 = vmatprep.subr.mxu0 0.0
  %175 = vmatpush1.msra.mxu0 %v137
  %176 = vmatprep.subr.mxu0 0.0
  %177 = vmatpush1.msra.mxu0 %v138
  %178 = vmatprep.subr.mxu0 0.0
  %179 = vmatpush1.msra.mxu0 0.0
  %180 = vmatprep.subr.mxu0 0.0
  %181 = vmatpush1.msra.mxu0 0.0
  %182 = vmatprep.subr.mxu0 0.0
  %183 = vmatpush1.msra.mxu0 0.0
  %184 = vmatprep.subr.mxu0 0.0
  %185 = vmatpush1.msra.mxu0 0.0
  %186 = vmatprep.subr.mxu0 0.0
  %187 = vmatpush1.msra.mxu0 0.0
  %188 = vmatprep.subr.mxu0 0.0
  %189 = vmatpush1.msra.mxu0 0.0
  %190 = vmatprep.subr.mxu0 0.0
  %191 = vmatpush1.msra.mxu0 0.0
  %192 = vmatprep.subr.mxu0 0.0
  %193 = vmatpush1.msra.mxu0 0.0
  %194 = vmatprep.subr.mxu0 0.0
  %195 = vmatpush1.msra.mxu0 0.0
  %196 = vmatprep.subr.mxu0 0.0
  %197 = vmatpush1.msra.mxu0 0.0
  %198 = vmatprep.subr.mxu0 0.0
  %199 = vmatpush1.msra.mxu0 0.0
  %200 = vmatprep.subr.mxu0 0.0
  %201 = vmatpush1.msra.mxu0 0.0
  %202 = vmatprep.subr.mxu0 0.0
  %203 = vmatpush1.msra.mxu0 0.0
  %204 = vmatprep.subr.mxu0 0.0
  %205 = vmatpush1.msra.mxu0 0.0
  %206 = vmatprep.subr.mxu0 0.0
  %207 = vmatpush1.msra.mxu0 0.0
  %208 = vmatprep.subr.mxu0 0.0
  %209 = vmatpush1.msra.mxu0 0.0
  %210 = vmatprep.mubr.f32.mxu0 0.0
  %211 = vmatmul.mubr.f32.gmra.mrb[0].mxu0 %v122
  %v212 = vpop.f32.mrb[0].mxu0
  %v213 = vadd.f32 %v144, %v212
  %v214 = vpop.f32.mrb[0].mxu0
  %215 = vdwg.mxu0
  %v216 = vmax.f32 %v213, 0.0
  %v217 = vld [vmem:[%s5] sm:$0xff]
  %v218 = vld [vmem:[%s5 + $0x8] sm:$0xff]
  %v219 = vld [vmem:[%s5 + $0x10] sm:$0xff]
  %v220 = vld [vmem:[%s5 + $0x18] sm:$0xff]
  %v221 = vld [vmem:[%s6] sm:$0x1]
  %v223 = vlaneseq
  %v224 = vshrl.u32 %v223, 7
  %v225 = vsub.s32 0, %v224
  %v226 = vrot.slane %v221, %v225
  %vm228 = vcmask 261120
  %v230 = vsel %vm228, %v216, 0
  %232 = vmatprep.subr.mxu0 0.0
  %233 = vmatpush1.msra.mxu0 %v217
  %234 = vmatprep.subr.mxu0 0.0
  %235 = vmatpush1.msra.mxu0 %v218
  %236 = vmatprep.subr.mxu0 0.0
  %237 = vmatpush1.msra.mxu0 %v219
  %238 = vmatprep.subr.mxu0 0.0
  %239 = vmatpush1.msra.mxu0 %v220
  %240 = vmatprep.subr.mxu0 0.0
  %241 = vmatpush1.msra.mxu0 0.0
  %242 = vmatprep.subr.mxu0 0.0
  %243 = vmatpush1.msra.mxu0 0.0
  %244 = vmatprep.subr.mxu0 0.0
  %245 = vmatpush1.msra.mxu0 0.0
  %246 = vmatprep.subr.mxu0 0.0
  %247 = vmatpush1.msra.mxu0 0.0
  %248 = vmatprep.subr.mxu0 0.0
  %249 = vmatpush1.msra.mxu0 0.0
  %250 = vmatprep.subr.mxu0 0.0
  %251 = vmatpush1.msra.mxu0 0.0
  %252 = vmatprep.subr.mxu0 0.0
  %253 = vmatpush1.msra.mxu0 0.0
  %254 = vmatprep.subr.mxu0 0.0
  %255 = vmatpush1.msra.mxu0 0.0
  %256 = vmatprep.subr.mxu0 0.0
  %257 = vmatpush1.msra.mxu0 0.0
  %258 = vmatprep.subr.mxu0 0.0
  %259 = vmatpush1.msra.mxu0 0.0
  %260 = vmatprep.subr.mxu0 0.0
  %261 = vmatpush1.msra.mxu0 0.0
  %262 = vmatprep.subr.mxu0 0.0
  %263 = vmatpush1.msra.mxu0 0.0
  %264 = vmatprep.subr.mxu0 0.0
  %265 = vmatpush1.msra.mxu0 0.0
  %266 = vmatprep.subr.mxu0 0.0
  %267 = vmatpush1.msra.mxu0 0.0
  %268 = vmatprep.subr.mxu0 0.0
  %269 = vmatpush1.msra.mxu0 0.0
  %270 = vmatprep.subr.mxu0 0.0
  %271 = vmatpush1.msra.mxu0 0.0
  %272 = vmatprep.subr.mxu0 0.0
  %273 = vmatpush1.msra.mxu0 0.0
  %274 = vmatprep.subr.mxu0 0.0
  %275 = vmatpush1.msra.mxu0 0.0
  %276 = vmatprep.subr.mxu0 0.0
  %277 = vmatpush1.msra.mxu0 0.0
  %278 = vmatprep.subr.mxu0 0.0
  %279 = vmatpush1.msra.mxu0 0.0
  %280 = vmatprep.subr.mxu0 0.0
  %281 = vmatpush1.msra.mxu0 0.0
  %282 = vmatprep.subr.mxu0 0.0
  %283 = vmatpush1.msra.mxu0 0.0
  %284 = vmatprep.subr.mxu0 0.0
  %285 = vmatpush1.msra.mxu0 0.0
  %286 = vmatprep.subr.mxu0 0.0
  %287 = vmatpush1.msra.mxu0 0.0
  %288 = vmatprep.subr.mxu0 0.0
  %289 = vmatpush1.msra.mxu0 0.0
  %290 = vmatprep.subr.mxu0 0.0
  %291 = vmatpush1.msra.mxu0 0.0
  %292 = vmatprep.subr.mxu0 0.0
  %293 = vmatpush1.msra.mxu0 0.0
  %294 = vmatprep.subr.mxu0 0.0
  %295 = vmatpush1.msra.mxu0 0.0
  %296 = vmatprep.mubr.f32.mxu0 0.0
  %297 = vmatmul.mubr.f32.gmra.mrb[0].mxu0 %v230
  %v298 = vpop.f32.mrb[0].mxu0
  %v299 = vadd.f32 %v226, %v298
  %v300 = vpop.f32.mrb[0].mxu0
  %301 = vdwg.mxu0
  %v302 = vmax.f32 %v299, 0.0
  %v303 = vld [vmem:[%s7] sm:$0xff]
  %v304 = vld [vmem:[%s8] sm:$0x1]
  %v306 = vlaneseq
  %v307 = vshrl.u32 %v306, 7
  %v308 = vsub.s32 0, %v307
  %v309 = vrot.slane %v304, %v308
  %vm311 = vcmask 64512
  %v313 = vsel %vm311, %v302, 0
  %315 = vmatprep.subr.mxu0 0.0
  %316 = vmatpush1.msra.mxu0 %v303
  %317 = vmatprep.subr.mxu0 0.0
  %318 = vmatpush1.msra.mxu0 0.0
  %319 = vmatprep.subr.mxu0 0.0
  %320 = vmatpush1.msra.mxu0 0.0
  %321 = vmatprep.subr.mxu0 0.0
  %322 = vmatpush1.msra.mxu0 0.0
  %323 = vmatprep.subr.mxu0 0.0
  %324 = vmatpush1.msra.mxu0 0.0
  %325 = vmatprep.subr.mxu0 0.0
  %326 = vmatpush1.msra.mxu0 0.0
  %327 = vmatprep.subr.mxu0 0.0
  %328 = vmatpush1.msra.mxu0 0.0
  %329 = vmatprep.subr.mxu0 0.0
  %330 = vmatpush1.msra.mxu0 0.0
  %331 = vmatprep.subr.mxu0 0.0
  %332 = vmatpush1.msra.mxu0 0.0
  %333 = vmatprep.subr.mxu0 0.0
  %334 = vmatpush1.msra.mxu0 0.0
  %335 = vmatprep.subr.mxu0 0.0
  %336 = vmatpush1.msra.mxu0 0.0
  %337 = vmatprep.subr.mxu0 0.0
  %338 = vmatpush1.msra.mxu0 0.0
  %339 = vmatprep.subr.mxu0 0.0
  %340 = vmatpush1.msra.mxu0 0.0
  %341 = vmatprep.subr.mxu0 0.0
  %342 = vmatpush1.msra.mxu0 0.0
  %343 = vmatprep.subr.mxu0 0.0
  %344 = vmatpush1.msra.mxu0 0.0
  %345 = vmatprep.subr.mxu0 0.0
  %346 = vmatpush1.msra.mxu0 0.0
  %347 = vmatprep.subr.mxu0 0.0
  %348 = vmatpush1.msra.mxu0 0.0
  %349 = vmatprep.subr.mxu0 0.0
  %350 = vmatpush1.msra.mxu0 0.0
  %351 = vmatprep.subr.mxu0 0.0
  %352 = vmatpush1.msra.mxu0 0.0
  %353 = vmatprep.subr.mxu0 0.0
  %354 = vmatpush1.msra.mxu0 0.0
  %355 = vmatprep.subr.mxu0 0.0
  %356 = vmatpush1.msra.mxu0 0.0
  %357 = vmatprep.subr.mxu0 0.0
  %358 = vmatpush1.msra.mxu0 0.0
  %359 = vmatprep.subr.mxu0 0.0
  %360 = vmatpush1.msra.mxu0 0.0
  %361 = vmatprep.subr.mxu0 0.0
  %362 = vmatpush1.msra.mxu0 0.0
  %363 = vmatprep.subr.mxu0 0.0
  %364 = vmatpush1.msra.mxu0 0.0
  %365 = vmatprep.subr.mxu0 0.0
  %366 = vmatpush1.msra.mxu0 0.0
  %367 = vmatprep.subr.mxu0 0.0
  %368 = vmatpush1.msra.mxu0 0.0
  %369 = vmatprep.subr.mxu0 0.0
  %370 = vmatpush1.msra.mxu0 0.0
  %371 = vmatprep.subr.mxu0 0.0
  %372 = vmatpush1.msra.mxu0 0.0
  %373 = vmatprep.subr.mxu0 0.0
  %374 = vmatpush1.msra.mxu0 0.0
  %375 = vmatprep.subr.mxu0 0.0
  %376 = vmatpush1.msra.mxu0 0.0
  %377 = vmatprep.subr.mxu0 0.0
  %378 = vmatpush1.msra.mxu0 0.0
  %379 = vmatprep.mubr.f32.mxu0 0.0
  %380 = vmatmul.mubr.f32.gmra.mrb[0].mxu0 %v313
  %v381 = vpop.f32.mrb[0].mxu0
  %v382 = vadd.f32 %v309, %v381
  %v383 = vpop.f32.mrb[0].mxu0
  %384 = vdwg.mxu0
  %vm385 = vcmask 15360
  %386 = vst.msk [vmem:[%s9] sm:$0xff] %vm385, %v382
  // Predicated region
  $region38: #{tpu_custom_call.1} parent=0 // pred_check
    _
  $region39: #{tpu_custom_call.1} parent=0 // pred_check_branch
    %388 = sbr.rel (0) target = $region41
  $region40: #{tpu_custom_call.1} parent=0 // pred_region
    _
  $region41: #{tpu_custom_call.1} parent=0 // pred_fallthru
    _
  // Predicated region
  $region42: #{tpu_custom_call.1} parent=0 // pred_check
    _
  $region43: #{tpu_custom_call.1} parent=0 // pred_check_branch
    %390 = sbr.rel (0) target = $region45
  $region44: #{tpu_custom_call.1} parent=0 // pred_region
    _
  $region45: #{tpu_custom_call.1} parent=0 // pred_fallthru
    _

</llo_original>
